<compile_context>
chip_gen: v7x
topology: tpu7x:2x2x1
jax: 0.10.0
libtpu: 0.0.40
codegen_flags: <defaults>
</compile_context>

<pallas_src>
import jax
import jax.numpy as jnp
from jax.experimental import pallas as pl
from jax.experimental.pallas import tpu as pltpu


def _cdiv(a: int, b: int) -> int:
    return (a + b - 1) // b


def _round_up(x: int, m: int) -> int:
    return _cdiv(x, m) * m


def _tied_head_kernel(x_ref, w_ref, b_ref, o_ref, acc_ref):
    # Grid = (B/tm, N/tn, D/tk).  The reduction axis k MUST stay innermost
    # ("arbitrary", last grid dim): the (i, j) output/accumulator block is
    # constant across k, so acc_ref stays resident in VMEM.
    k = pl.program_id(2)

    @pl.when(k == 0)
    def _init():
        # Fold the bias add into the accumulator init (broadcast over rows).
        acc_ref[...] = jnp.broadcast_to(b_ref[...], acc_ref.shape)

    # (tm, tk) @ (tk, tn) — the table was laid out as (D_pad, N_pad) once at
    # head construction, so the RHS tile feeds the MXU without any in-kernel
    # transpose.  f32 accumulation regardless of operand dtype.
    acc_ref[...] += jnp.dot(x_ref[...], w_ref[...],
                            preferred_element_type=jnp.float32)

    @pl.when(k == pl.num_programs(2) - 1)
    def _store():
        # Single write of the finished block, cast fused into the store.
        o_ref[...] = acc_ref[...].astype(o_ref.dtype)


class EmbeddingTablePredictionHead:
    """Tied-embedding classification head with the table layout cached.

    __init__ does the one-time layout work (transpose to (D, N), zero-pad to
    tile multiples, optional compute-dtype cast).  __call__ only pads the
    activation and launches the kernel — the multi-GB table is never
    re-laid-out per step.
    """

    def __init__(self, weight, bias, *, compute_dtype=None,
                 out_dtype=jnp.float32, tm=256, tn=2048, tk=1024):
        # For training-scale batches (B >> 256) raise tm (e.g. 512) to halve
        # the weight re-stream; bf16 compute_dtype is recommended on v7x.
        N, D = weight.shape
        assert bias.shape == (N,), "bias must be (num_classes,)"
        self.N, self.D = N, D
        self.out_dtype = jnp.dtype(out_dtype)
        self.w_dtype = jnp.dtype(compute_dtype) if compute_dtype is not None \
            else jnp.dtype(weight.dtype)
        self.tm_max = tm

        # ---- derive N/D tiles (lane-aligned, minimal over-padding) ----
        n_pad0 = _round_up(N, 128)
        d_pad0 = _round_up(D, 128)
        nb_n = _cdiv(n_pad0, tn)
        self.tn = _round_up(_cdiv(n_pad0, nb_n), 128)
        # v7x megacore: when the batch grid collapses to 1 (decode), N is the
        # only parallel axis — keep >= 2 N-blocks when it divides cleanly so
        # both TensorCores get work.
        if nb_n == 1 and n_pad0 >= 256 and n_pad0 % 256 == 0:
            nb_n, self.tn = 2, n_pad0 // 2
        self.N_pad = nb_n * self.tn

        nb_k = _cdiv(d_pad0, tk)
        self.tk = _round_up(_cdiv(d_pad0, nb_k), 128)
        self.D_pad = nb_k * self.tk

        # ---- one-time table layout (cached) ----
        # transpose to (D, N), zero-pad (zero K-rows add nothing to the dot;
        # padded output columns are sliced off / ignored), optional cast.
        w_t = jnp.asarray(weight).T
        w_p = jnp.pad(w_t, ((0, self.D_pad - D), (0, self.N_pad - N)))
        self.w = w_p.astype(self.w_dtype)
        self.b = jnp.pad(jnp.asarray(bias, jnp.float32),
                         (0, self.N_pad - N)).reshape(1, self.N_pad)

    def __call__(self, x, *, return_padded=False):
        B, D = x.shape
        assert D == self.D, "hidden dim mismatch"
        tn, tk = self.tn, self.tk

        # dtype-aware sublane rounding for the M (batch) dim: 8 rows for f32,
        # 16 for bf16, 32 for int8/fp8 — keeps x / out tiles on the packed path.
        min_isz = min(self.w_dtype.itemsize, self.out_dtype.itemsize)
        sub = 8 * (4 // min_isz)
        b_pad0 = _round_up(B, sub)
        nb_m = _cdiv(b_pad0, self.tm_max)
        tm = _round_up(_cdiv(b_pad0, nb_m), sub)   # minimal M over-padding
        B_pad = nb_m * tm

        x_p = jnp.pad(x, ((0, B_pad - B), (0, self.D_pad - D))).astype(self.w_dtype)

        grid = (B_pad // tm, self.N_pad // tn, self.D_pad // tk)

        # Scoped-VMEM budget: actual double-buffered footprint + headroom,
        # capped at 48 MiB so it is safe on every generation (v7x: 64 MiB phys).
        w_isz, o_isz = self.w_dtype.itemsize, self.out_dtype.itemsize
        footprint = (2 * (tm * tk + tk * tn) * w_isz   # double-buffered x / W
                     + 2 * tn * 4                      # double-buffered bias
                     + 2 * tm * tn * o_isz             # double-buffered output
                     + tm * tn * 4)                    # f32 accumulator scratch
        vmem_limit = int(min(max(footprint + (8 << 20), 16 << 20), 48 << 20))

        out = pl.pallas_call(
            _tied_head_kernel,
            out_shape=jax.ShapeDtypeStruct((B_pad, self.N_pad), self.out_dtype),
            grid_spec=pltpu.PrefetchScalarGridSpec(
                num_scalar_prefetch=0,
                grid=grid,
                in_specs=[
                    pl.BlockSpec((tm, tk), lambda i, j, k: (i, k)),   # x   (B_pad, D_pad)
                    pl.BlockSpec((tk, tn), lambda i, j, k: (k, j)),   # W^T (D_pad, N_pad)
                    pl.BlockSpec((1, tn), lambda i, j, k: (0, j)),    # bias (1, N_pad)
                ],
                out_specs=pl.BlockSpec((tm, tn), lambda i, j, k: (i, j)),
                scratch_shapes=[pltpu.VMEM((tm, tn), jnp.float32)],
            ),
            compiler_params=pltpu.CompilerParams(
                dimension_semantics=("parallel", "parallel", "arbitrary"),
                vmem_limit_bytes=vmem_limit,
            ),
        )(x_p, self.w, self.b)

        if return_padded:
            return out            # skip the extra HBM pass if downstream tolerates padding
        return out[:B, :self.N]


def embedding_table_prediction(x, weight, bias, **kwargs):
    """One-shot convenience wrapper. For repeated steps, build
    EmbeddingTablePredictionHead once and reuse it (table layout is cached)."""
    return EmbeddingTablePredictionHead(weight, bias, **kwargs)(x)


# TODO(synk): schema / column-selection bookkeeping (output_schema, add_selection,
# should_apply_contrastive) is metadata-only and has no Pallas equivalent.

if __name__ == "__main__":
    # Small shapes consistent with the module; deliberately NOT tile-aligned to
    # exercise the padding paths (B 6->8/16, D 64->128, N 300->384).
    num_classes = 300
    dim = 64
    batch = 6

    key = jax.random.PRNGKey(0)
    k_w, k_b, k_x = jax.random.split(key, 3)

    weight = jax.random.normal(k_w, (num_classes, dim), dtype=jnp.float32) * 0.02
    # Module initializes bias to zeros; use a small nonzero bias so the
    # bias-add path is actually validated.
    bias = jax.random.normal(k_b, (num_classes,), dtype=jnp.float32) * 0.01
    x = jax.random.normal(k_x, (batch, dim), dtype=jnp.float32)

    ref = x @ weight.T + bias

    # f32 path (matches the torch module's F.linear numerics; f32 logits out).
    head = EmbeddingTablePredictionHead(weight, bias)
    out = jax.block_until_ready(head(x))
    assert out.shape == (batch, num_classes) and out.dtype == jnp.float32
    assert jnp.allclose(out, ref, atol=2e-5, rtol=2e-5), "f32 mismatch vs reference"

    # Second call reuses the cached transposed/padded table (no per-step relayout).
    out2 = jax.block_until_ready(head(x))
    assert jnp.allclose(out2, out)

    # bf16-operand path (f32 accumulation, f32 logits) — recommended for real
    # vocab-sized heads on v7x; looser tolerance due to operand rounding.
    head_bf16 = EmbeddingTablePredictionHead(weight, bias, compute_dtype=jnp.bfloat16)
    out_bf16 = jax.block_until_ready(head_bf16(x))
    assert out_bf16.dtype == jnp.float32
    assert jnp.allclose(out_bf16, ref, atol=5e-3, rtol=5e-2), "bf16 mismatch vs reference"

    # One-shot functional wrapper still works.
    out_fn = jax.block_until_ready(embedding_table_prediction(x, weight, bias))
    assert jnp.allclose(out_fn, ref, atol=2e-5, rtol=2e-5)

    print("KERNEL_OK")
</pallas_src>

<mosaic_0001>
module attributes {stable_mosaic.version = 11 : i64} {
  func.func @_tied_head_kernel(%arg0: i32, %arg1: i32, %arg2: i32, %arg3: memref<8x128xf32, #tpu.memory_space<vmem>>, %arg4: memref<128x384xf32, #tpu.memory_space<vmem>>, %arg5: memref<1x384xf32, #tpu.memory_space<vmem>>, %arg6: memref<8x384xf32, #tpu.memory_space<vmem>>, %arg7: memref<8x384xf32, #tpu.memory_space<vmem>>) attributes {dimension_semantics = [#tpu.dimension_semantics<parallel>, #tpu.dimension_semantics<parallel>, #tpu.dimension_semantics<arbitrary>], iteration_bounds = array<i64: 1, 1, 1>, scalar_prefetch = 0 : i64, scratch_operands = 1 : i64, tpu.core_type = #tpu.core_type<tc>, window_params = [{transform_indices = @transform_0, window_bounds = array<i64: 8, 128>}, {transform_indices = @transform_1, window_bounds = array<i64: 128, 384>}, {transform_indices = @transform_2, window_bounds = array<i64: 1, 384>}, {transform_indices = @transform_3, window_bounds = array<i64: 8, 384>}]} {
    %c0_i32 = arith.constant 0 : i32
    %0 = arith.cmpi eq, %arg2, %c0_i32 : i32
    %1 = arith.extui %0 : i1 to i32
    %c0_i32_0 = arith.constant 0 : i32
    %2 = arith.cmpi ne, %1, %c0_i32_0 : i32
    scf.if %2 {
      %c0_10 = arith.constant 0 : index
      %c0_11 = arith.constant 0 : index
      %12 = vector.load %arg5[%c0_10, %c0_11] : memref<1x384xf32, #tpu.memory_space<vmem>>, vector<1x384xf32>
      %13 = vector.shape_cast %12 : vector<1x384xf32> to vector<1x384xf32>
      %14 = vector.broadcast %13 : vector<1x384xf32> to vector<8x384xf32>
      %c0_12 = arith.constant 0 : index
      %c0_13 = arith.constant 0 : index
      %15 = vector.load %arg7[%c0_12, %c0_13] : memref<8x384xf32, #tpu.memory_space<vmem>>, vector<8x384xf32>
      tpu.vector_store %arg7[%c0_12, %c0_13], %14 {strides = array<i32>} : memref<8x384xf32, #tpu.memory_space<vmem>>, vector<8x384xf32>,
    } else {
    }
    %c0 = arith.constant 0 : index
    %c0_1 = arith.constant 0 : index
    %3 = vector.load %arg7[%c0, %c0_1] : memref<8x384xf32, #tpu.memory_space<vmem>>, vector<8x384xf32>
    %c0_2 = arith.constant 0 : index
    %c0_3 = arith.constant 0 : index
    %4 = vector.load %arg3[%c0_2, %c0_3] : memref<8x128xf32, #tpu.memory_space<vmem>>, vector<8x128xf32>
    %c0_4 = arith.constant 0 : index
    %c0_5 = arith.constant 0 : index
    %5 = vector.load %arg4[%c0_4, %c0_5] : memref<128x384xf32, #tpu.memory_space<vmem>>, vector<128x384xf32>
    %cst = arith.constant dense<0.000000e+00> : vector<8x384xf32>
    %6 = tpu.matmul %4, %5, %cst {dimension_numbers = #tpu.dot_dimension_numbers<[1], [0], [0], [1], [0, 0, 1, 1], [], []>} : vector<8x128xf32>, vector<128x384xf32>, vector<8x384xf32> -> vector<8x384xf32>
    %7 = arith.addf %3, %6 : vector<8x384xf32>
    %c0_6 = arith.constant 0 : index
    %c0_7 = arith.constant 0 : index
    %8 = vector.load %arg7[%c0_6, %c0_7] : memref<8x384xf32, #tpu.memory_space<vmem>>, vector<8x384xf32>
    tpu.vector_store %arg7[%c0_6, %c0_7], %7 {strides = array<i32>} : memref<8x384xf32, #tpu.memory_space<vmem>>, vector<8x384xf32>,
    %c0_i32_8 = arith.constant 0 : i32
    %9 = arith.cmpi eq, %arg2, %c0_i32_8 : i32
    %10 = arith.extui %9 : i1 to i32
    %c0_i32_9 = arith.constant 0 : i32
    %11 = arith.cmpi ne, %10, %c0_i32_9 : i32
    scf.if %11 {
      %c0_10 = arith.constant 0 : index
      %c0_11 = arith.constant 0 : index
      %12 = vector.load %arg7[%c0_10, %c0_11] : memref<8x384xf32, #tpu.memory_space<vmem>>, vector<8x384xf32>
      %c0_12 = arith.constant 0 : index
      %c0_13 = arith.constant 0 : index
      %13 = vector.load %arg6[%c0_12, %c0_13] : memref<8x384xf32, #tpu.memory_space<vmem>>, vector<8x384xf32>
      tpu.vector_store %arg6[%c0_12, %c0_13], %12 {strides = array<i32>} : memref<8x384xf32, #tpu.memory_space<vmem>>, vector<8x384xf32>,
    } else {
    }
    return
  }
  func.func @transform_0(%arg0: i32, %arg1: i32, %arg2: i32) -> (i32, i32) {
    %c0_i32 = arith.constant 0 : i32
    return %arg0, %arg2 : i32, i32
  }
  func.func @transform_1(%arg0: i32, %arg1: i32, %arg2: i32) -> (i32, i32) {
    %c0_i32 = arith.constant 0 : i32
    return %arg2, %arg1 : i32, i32
  }
  func.func @transform_2(%arg0: i32, %arg1: i32, %arg2: i32) -> (i32, i32) {
    %c0_i32 = arith.constant 0 : i32
    %c0_i32_0 = arith.constant 0 : i32
    return %c0_i32, %arg1 : i32, i32
  }
  func.func @transform_3(%arg0: i32, %arg1: i32, %arg2: i32) -> (i32, i32) {
    %c0_i32 = arith.constant 0 : i32
    return %arg0, %arg1 : i32, i32
  }
}

</mosaic_0001>

<llo_original>
// kernel: tpu_custom_call.1
$region0: #{tpu_custom_call.1}
  #allocation0 [shape = 'u32[]', space=smem, size = 0x4, offset = 0x4, fixed_abs, tag = 'smem constant byte address 0x4 - core index']
  #allocation1 [shape = 'u32[144,128]{1,0:T(1,128)}', space=vmem, size = 0x12000, scoped, tag = 'internal scratch']
  #allocation2 [shape = 'f32[8,384]{1,0:T(8,128)}', space=vmem, size = 0x3000, scoped, tag = 'scratch operand']
  %s0 = inlined_call_operand.hbm [shape: f32[8,128], index: 0, kind: input, shape index: {}]
  %s1 = inlined_call_operand.hbm [shape: f32[128,384], index: 1, kind: input, shape index: {}]
  %s2 = inlined_call_operand.vmem [shape: f32[1,384], index: 2, kind: input, shape index: {}]
  %s3 = inlined_call_operand.hbm [shape: f32[8,384], index: 3, kind: output, shape index: {}]
  %s4 = sld [smem:[#allocation0]]
  $region38: #{tpu_custom_call.1} parent=0
    _
  %s6 = ssub.s32 1, %s4
  %s7 = scalar_select 0, %s6, %s4
  $region1: #{tpu_custom_call.1} parent=0
    #allocation3 [shape = 'u8[4096]{0}', space=vmem, size = 0x1000, scoped, tag = 'input window, operand 0, single buffered']
    #allocation4 [shape = 's32[1]{0}', space=sflag, size = 0x4, scoped, tag = 'scoped memory for tpu_custom_call.1']
    #allocation5 [shape = 's32[1]{0}', space=sflag, size = 0x4, scoped, tag = 'scoped memory for tpu_custom_call.1']
    #allocation6 [shape = 'u8[196608]{0}', space=vmem, size = 0x30000, scoped, tag = 'input window, operand 1, single buffered']
    #allocation7 [shape = 's32[1]{0}', space=sflag, size = 0x4, scoped, tag = 'scoped memory for tpu_custom_call.1']
    #allocation8 [shape = 'u8[12288]{0}', space=vmem, size = 0x3000, scoped, tag = 'output window, operand 0, single buffered']
    %8 = vsyncpa [#allocation4], 0
    %9 = vsyncpa [#allocation7], 0
    %10 = vsyncpa [#allocation5], 0
    // Predicated region
    $region2: #{tpu_custom_call.1} parent=1 // pred_check
      _
    $region3: #{tpu_custom_call.1} parent=1 // pred_check_branch
      %12 = sbr.rel (0) target = $region5
    $region4: #{tpu_custom_call.1} parent=1 // pred_region
      %s14 = ssub.s32 128, 128
      %15 = vsyncadd [#allocation4], %s14
      %s17 = sshll.u32 [#allocation3], 4
      %s18 = int_to_ptr.vmem [resolvable:$true] %s17
      %20 = dma.hbm_to_vmem [thread:$0]  %s0, 128, %s18, [#allocation4]
    $region5: #{tpu_custom_call.1} parent=1 // pred_fallthru
      _
    // Predicated region
    $region6: #{tpu_custom_call.1} parent=1 // pred_check
      _
    $region7: #{tpu_custom_call.1} parent=1 // pred_check_branch
      %22 = sbr.rel (0) target = $region9
    $region8: #{tpu_custom_call.1} parent=1 // pred_region
      %s24 = ssub.s32 6144, 6144
      %25 = vsyncadd [#allocation7], %s24
      %s26 = sshll.u32 [#allocation6], 4
      %s27 = int_to_ptr.vmem [resolvable:$true] %s26
      %32 = dma.hbm_to_vmem [thread:$0]  %s1, 6144, %s27, [#allocation7], 384, 384, 24
    $region9: #{tpu_custom_call.1} parent=1 // pred_fallthru
      _
    // Predicated region
    $region10: #{tpu_custom_call.1} parent=1 // pred_check
      _
    $region11: #{tpu_custom_call.1} parent=1 // pred_check_branch
      %34 = sbr.rel (0) target = $region13
    $region12: #{tpu_custom_call.1} parent=1 // pred_region
      _
    $region13: #{tpu_custom_call.1} parent=1 // pred_fallthru
      _
    // Predicated region
    $region14: #{tpu_custom_call.1} parent=1 // pred_check
      _
    $region15: #{tpu_custom_call.1} parent=1 // pred_check_branch
      %36 = sbr.rel (0) target = $region17
    $region16: #{tpu_custom_call.1} parent=1 // pred_region
      %37 = dma.done [#allocation4], 128
    $region17: #{tpu_custom_call.1} parent=1 // pred_fallthru
      _
    // Predicated region
    $region18: #{tpu_custom_call.1} parent=1 // pred_check
      _
    $region19: #{tpu_custom_call.1} parent=1 // pred_check_branch
      %39 = sbr.rel (0) target = $region21
    $region20: #{tpu_custom_call.1} parent=1 // pred_region
      %40 = dma.done [#allocation7], 6144
    $region21: #{tpu_custom_call.1} parent=1 // pred_fallthru
      _
    %p41 = scmp.eq.s32.totalorder 0, 0
    // Predicated region
    $region22: #{tpu_custom_call.1} parent=1 // pred_check
      %p42 = pneg %p41
    $region23: #{tpu_custom_call.1} parent=1 // pred_check_branch
      %44 = sbr.rel (%p42) target = $region25
    $region24: #{tpu_custom_call.1} parent=1 // pred_region
      %v45 = vld [vmem:[%s2] sm:$0x7]
      %v47 = vlaneseq
      %v48 = vshrl.u32 %v47, 7
      %v49 = vsub.s32 0, %v48
      %v50 = vrot.slane %v45, %v49
      %v51 = vlaneseq
      %v52 = vshrl.u32 %v51, 7
      %v53 = vsub.s32 1, %v52
      %v54 = vrot.slane %v45, %v53
      %v55 = vlaneseq
      %v56 = vshrl.u32 %v55, 7
      %v57 = vsub.s32 2, %v56
      %v58 = vrot.slane %v45, %v57
      %62 = vst [vmem:[#allocation2] sm:$0xff] %v50
      %63 = vst [vmem:[#allocation2 + $0x8] sm:$0xff] %v54
      %64 = vst [vmem:[#allocation2 + $0x10] sm:$0xff] %v58
    $region25: #{tpu_custom_call.1} parent=1 // pred_fallthru
      _
    %v65 = vld [vmem:[#allocation2] sm:$0xff]
    %v66 = vld [vmem:[#allocation2 + $0x8] sm:$0xff]
    %v67 = vld [vmem:[#allocation2 + $0x10] sm:$0xff]
    %v68 = vld [vmem:[#allocation3] sm:$0xff]
    %v69 = vld [vmem:[#allocation6] sm:$0xff]
    %v70 = vld [vmem:[#allocation6 + $0x8] sm:$0xff]
    %v71 = vld [vmem:[#allocation6 + $0x10] sm:$0xff]
    %v72 = vld [vmem:[#allocation6 + $0x18] sm:$0xff]
    %v73 = vld [vmem:[#allocation6 + $0x20] sm:$0xff]
    %v74 = vld [vmem:[#allocation6 + $0x28] sm:$0xff]
    %v75 = vld [vmem:[#allocation6 + $0x30] sm:$0xff]
    %v76 = vld [vmem:[#allocation6 + $0x38] sm:$0xff]
    %v77 = vld [vmem:[#allocation6 + $0x40] sm:$0xff]
    %v78 = vld [vmem:[#allocation6 + $0x48] sm:$0xff]
    %v79 = vld [vmem:[#allocation6 + $0x50] sm:$0xff]
    %v80 = vld [vmem:[#allocation6 + $0x58] sm:$0xff]
    %v81 = vld [vmem:[#allocation6 + $0x60] sm:$0xff]
    %v82 = vld [vmem:[#allocation6 + $0x68] sm:$0xff]
    %v83 = vld [vmem:[#allocation6 + $0x70] sm:$0xff]
    %v84 = vld [vmem:[#allocation6 + $0x78] sm:$0xff]
    %v85 = vld [vmem:[#allocation6 + $0x80] sm:$0xff]
    %v86 = vld [vmem:[#allocation6 + $0x88] sm:$0xff]
    %v87 = vld [vmem:[#allocation6 + $0x90] sm:$0xff]
    %v88 = vld [vmem:[#allocation6 + $0x98] sm:$0xff]
    %v89 = vld [vmem:[#allocation6 + $0xa0] sm:$0xff]
    %v90 = vld [vmem:[#allocation6 + $0xa8] sm:$0xff]
    %v91 = vld [vmem:[#allocation6 + $0xb0] sm:$0xff]
    %v92 = vld [vmem:[#allocation6 + $0xb8] sm:$0xff]
    %v93 = vld [vmem:[#allocation6 + $0xc0] sm:$0xff]
    %v94 = vld [vmem:[#allocation6 + $0xc8] sm:$0xff]
    %v95 = vld [vmem:[#allocation6 + $0xd0] sm:$0xff]
    %v96 = vld [vmem:[#allocation6 + $0xd8] sm:$0xff]
    %v97 = vld [vmem:[#allocation6 + $0xe0] sm:$0xff]
    %v98 = vld [vmem:[#allocation6 + $0xe8] sm:$0xff]
    %v99 = vld [vmem:[#allocation6 + $0xf0] sm:$0xff]
    %v100 = vld [vmem:[#allocation6 + $0xf8] sm:$0xff]
    %v101 = vld [vmem:[#allocation6 + $0x100] sm:$0xff]
    %v102 = vld [vmem:[#allocation6 + $0x108] sm:$0xff]
    %v103 = vld [vmem:[#allocation6 + $0x110] sm:$0xff]
    %v104 = vld [vmem:[#allocation6 + $0x118] sm:$0xff]
    %v105 = vld [vmem:[#allocation6 + $0x120] sm:$0xff]
    %v106 = vld [vmem:[#allocation6 + $0x128] sm:$0xff]
    %v107 = vld [vmem:[#allocation6 + $0x130] sm:$0xff]
    %v108 = vld [vmem:[#allocation6 + $0x138] sm:$0xff]
    %v109 = vld [vmem:[#allocation6 + $0x140] sm:$0xff]
    %v110 = vld [vmem:[#allocation6 + $0x148] sm:$0xff]
    %v111 = vld [vmem:[#allocation6 + $0x150] sm:$0xff]
    %v112 = vld [vmem:[#allocation6 + $0x158] sm:$0xff]
    %v113 = vld [vmem:[#allocation6 + $0x160] sm:$0xff]
    %v114 = vld [vmem:[#allocation6 + $0x168] sm:$0xff]
    %v115 = vld [vmem:[#allocation6 + $0x170] sm:$0xff]
    %v116 = vld [vmem:[#allocation6 + $0x178] sm:$0xff]
    %117 = vmatprep.subr.mxu0 %v70
    %118 = vmatpush1.msra.mxu0 %v69
    %119 = vmatprep.subr.mxu0 %v73
    %120 = vmatpush1.msra.mxu0 %v72
    %121 = vmatprep.subr.mxu0 %v76
    %122 = vmatpush1.msra.mxu0 %v75
    %123 = vmatprep.subr.mxu0 %v79
    %124 = vmatpush1.msra.mxu0 %v78
    %125 = vmatprep.subr.mxu0 %v82
    %126 = vmatpush1.msra.mxu0 %v81
    %127 = vmatprep.subr.mxu0 %v85
    %128 = vmatpush1.msra.mxu0 %v84
    %129 = vmatprep.subr.mxu0 %v88
    %130 = vmatpush1.msra.mxu0 %v87
    %131 = vmatprep.subr.mxu0 %v91
    %132 = vmatpush1.msra.mxu0 %v90
    %133 = vmatprep.subr.mxu0 %v94
    %134 = vmatpush1.msra.mxu0 %v93
    %135 = vmatprep.subr.mxu0 %v97
    %136 = vmatpush1.msra.mxu0 %v96
    %137 = vmatprep.subr.mxu0 %v100
    %138 = vmatpush1.msra.mxu0 %v99
    %139 = vmatprep.subr.mxu0 %v103
    %140 = vmatpush1.msra.mxu0 %v102
    %141 = vmatprep.subr.mxu0 %v106
    %142 = vmatpush1.msra.mxu0 %v105
    %143 = vmatprep.subr.mxu0 %v109
    %144 = vmatpush1.msra.mxu0 %v108
    %145 = vmatprep.subr.mxu0 %v112
    %146 = vmatpush1.msra.mxu0 %v111
    %147 = vmatprep.subr.mxu0 %v115
    %148 = vmatpush1.msra.mxu0 %v114
    %149 = vmatprep.subr.mxu0 0.0
    %150 = vmatpush1.msra.mxu0 0.0
    %151 = vmatprep.subr.mxu0 0.0
    %152 = vmatpush1.msra.mxu0 0.0
    %153 = vmatprep.subr.mxu0 0.0
    %154 = vmatpush1.msra.mxu0 0.0
    %155 = vmatprep.subr.mxu0 0.0
    %156 = vmatpush1.msra.mxu0 0.0
    %157 = vmatprep.subr.mxu0 0.0
    %158 = vmatpush1.msra.mxu0 0.0
    %159 = vmatprep.subr.mxu0 0.0
    %160 = vmatpush1.msra.mxu0 0.0
    %161 = vmatprep.subr.mxu0 0.0
    %162 = vmatpush1.msra.mxu0 0.0
    %163 = vmatprep.subr.mxu0 0.0
    %164 = vmatpush1.msra.mxu0 0.0
    %165 = vmatprep.subr.mxu0 0.0
    %166 = vmatpush1.msra.mxu0 0.0
    %167 = vmatprep.subr.mxu0 0.0
    %168 = vmatpush1.msra.mxu0 0.0
    %169 = vmatprep.subr.mxu0 0.0
    %170 = vmatpush1.msra.mxu0 0.0
    %171 = vmatprep.subr.mxu0 0.0
    %172 = vmatpush1.msra.mxu0 0.0
    %173 = vmatprep.subr.mxu0 0.0
    %174 = vmatpush1.msra.mxu0 0.0
    %175 = vmatprep.subr.mxu0 0.0
    %176 = vmatpush1.msra.mxu0 0.0
    %177 = vmatprep.subr.mxu0 0.0
    %178 = vmatpush1.msra.mxu0 0.0
    %179 = vmatprep.subr.mxu0 0.0
    %180 = vmatpush1.msra.mxu0 0.0
    %181 = vmatprep.mubr.f32.mxu0 0.0
    %182 = vmatmul.mubr.f32.gmra.mrb[0].mxu0 %v68
    %v183 = vpop.f32.mrb[0].mxu0
    %v184 = vadd.f32 0.0, %v183
    %v185 = vpop.f32.mrb[0].mxu0
    %v186 = vadd.f32 0.0, %v185
    %187 = vdwg.mxu0
    %188 = vmatprep.subr.mxu0 0.0
    %189 = vmatpush1.msra.mxu0 %v71
    %190 = vmatprep.subr.mxu0 0.0
    %191 = vmatpush1.msra.mxu0 %v74
    %192 = vmatprep.subr.mxu0 0.0
    %193 = vmatpush1.msra.mxu0 %v77
    %194 = vmatprep.subr.mxu0 0.0
    %195 = vmatpush1.msra.mxu0 %v80
    %196 = vmatprep.subr.mxu0 0.0
    %197 = vmatpush1.msra.mxu0 %v83
    %198 = vmatprep.subr.mxu0 0.0
    %199 = vmatpush1.msra.mxu0 %v86
    %200 = vmatprep.subr.mxu0 0.0
    %201 = vmatpush1.msra.mxu0 %v89
    %202 = vmatprep.subr.mxu0 0.0
    %203 = vmatpush1.msra.mxu0 %v92
    %204 = vmatprep.subr.mxu0 0.0
    %205 = vmatpush1.msra.mxu0 %v95
    %206 = vmatprep.subr.mxu0 0.0
    %207 = vmatpush1.msra.mxu0 %v98
    %208 = vmatprep.subr.mxu0 0.0
    %209 = vmatpush1.msra.mxu0 %v101
    %210 = vmatprep.subr.mxu0 0.0
    %211 = vmatpush1.msra.mxu0 %v104
    %212 = vmatprep.subr.mxu0 0.0
    %213 = vmatpush1.msra.mxu0 %v107
    %214 = vmatprep.subr.mxu0 0.0
    %215 = vmatpush1.msra.mxu0 %v110
    %216 = vmatprep.subr.mxu0 0.0
    %217 = vmatpush1.msra.mxu0 %v113
    %218 = vmatprep.subr.mxu0 0.0
    %219 = vmatpush1.msra.mxu0 %v116
    %220 = vmatprep.subr.mxu0 0.0
    %221 = vmatpush1.msra.mxu0 0.0
    %222 = vmatprep.subr.mxu0 0.0
    %223 = vmatpush1.msra.mxu0 0.0
    %224 = vmatprep.subr.mxu0 0.0
    %225 = vmatpush1.msra.mxu0 0.0
    %226 = vmatprep.subr.mxu0 0.0
    %227 = vmatpush1.msra.mxu0 0.0
    %228 = vmatprep.subr.mxu0 0.0
    %229 = vmatpush1.msra.mxu0 0.0
    %230 = vmatprep.subr.mxu0 0.0
    %231 = vmatpush1.msra.mxu0 0.0
    %232 = vmatprep.subr.mxu0 0.0
    %233 = vmatpush1.msra.mxu0 0.0
    %234 = vmatprep.subr.mxu0 0.0
    %235 = vmatpush1.msra.mxu0 0.0
    %236 = vmatprep.subr.mxu0 0.0
    %237 = vmatpush1.msra.mxu0 0.0
    %238 = vmatprep.subr.mxu0 0.0
    %239 = vmatpush1.msra.mxu0 0.0
    %240 = vmatprep.subr.mxu0 0.0
    %241 = vmatpush1.msra.mxu0 0.0
    %242 = vmatprep.subr.mxu0 0.0
    %243 = vmatpush1.msra.mxu0 0.0
    %244 = vmatprep.subr.mxu0 0.0
    %245 = vmatpush1.msra.mxu0 0.0
    %246 = vmatprep.subr.mxu0 0.0
    %247 = vmatpush1.msra.mxu0 0.0
    %248 = vmatprep.subr.mxu0 0.0
    %249 = vmatpush1.msra.mxu0 0.0
    %250 = vmatprep.subr.mxu0 0.0
    %251 = vmatpush1.msra.mxu0 0.0
    %252 = vmatprep.mubr.f32.mxu0 0.0
    %253 = vmatmul.mubr.f32.gmra.mrb[0].mxu0 %v68
    %v254 = vpop.f32.mrb[0].mxu0
    %v255 = vadd.f32 0.0, %v254
    %v256 = vpop.f32.mrb[0].mxu0
    %257 = vdwg.mxu0
    %v258 = vadd.f32 %v65, %v184
    %v259 = vadd.f32 %v66, %v186
    %v260 = vadd.f32 %v67, %v255
    %261 = vst [vmem:[#allocation2] sm:$0xff] %v258
    %262 = vst [vmem:[#allocation2 + $0x8] sm:$0xff] %v259
    %263 = vst [vmem:[#allocation2 + $0x10] sm:$0xff] %v260
    // Predicated region
    $region26: #{tpu_custom_call.1} parent=1 // pred_check
      %p264 = pneg %p41
    $region27: #{tpu_custom_call.1} parent=1 // pred_check_branch
      %266 = sbr.rel (%p264) target = $region29
    $region28: #{tpu_custom_call.1} parent=1 // pred_region
      %v267 = vld [vmem:[#allocation2] sm:$0xff]
      %v268 = vld [vmem:[#allocation2 + $0x8] sm:$0xff]
      %v269 = vld [vmem:[#allocation2 + $0x10] sm:$0xff]
      %270 = vst [vmem:[#allocation8] sm:$0xff] %v267
      %271 = vst [vmem:[#allocation8 + $0x8] sm:$0xff] %v268
      %272 = vst [vmem:[#allocation8 + $0x10] sm:$0xff] %v269
    $region29: #{tpu_custom_call.1} parent=1 // pred_fallthru
      _
    // Predicated region
    $region30: #{tpu_custom_call.1} parent=1 // pred_check
      _
    $region31: #{tpu_custom_call.1} parent=1 // pred_check_branch
      %274 = sbr.rel (0) target = $region33
    $region32: #{tpu_custom_call.1} parent=1 // pred_region
      %s276 = ssub.s32 384, 384
      %277 = vsyncadd [#allocation5], %s276
      %s279 = sshll.u32 [#allocation8], 4
      %s280 = int_to_ptr.vmem [resolvable:$true] %s279
      %282 = dma.vmem_to_hbm [thread:$0]  %s280, 384, %s3, [#allocation5]
    $region33: #{tpu_custom_call.1} parent=1 // pred_fallthru
      _
    // Predicated region
    $region34: #{tpu_custom_call.1} parent=1 // pred_check
      _
    $region35: #{tpu_custom_call.1} parent=1 // pred_check_branch
      %284 = sbr.rel (0) target = $region37
    $region36: #{tpu_custom_call.1} parent=1 // pred_region
      %285 = dma.done [#allocation5], 384
    $region37: #{tpu_custom_call.1} parent=1 // pred_fallthru
      _
    %286 = vsyncpa [#allocation4], 1
    %287 = vsyncpa [#allocation7], 1
    %288 = vsyncpa [#allocation5], 1

</llo_original>
